<compile_context>
chip_gen: v5e
topology: v5e:2x2
jax: 0.10.0
libtpu: 0.0.40
codegen_flags: <defaults>
</compile_context>

<pallas_src>
import jax
import jax.numpy as jnp
from jax.experimental import pallas as pl
from jax.experimental.pallas import tpu as pltpu

INPUT_SIZE = 28 * 28   # 784
HIDDEN_SIZE = 5
BATCH = 8


def mlp_kernel(x_ref, w1_ref, b1_ref, w2_ref, b2_ref, o_ref):
    # x: (TB, IN), w1: (H, IN)  -- contract last dims -> h_t: (H, TB)
    h_t = jax.lax.dot_general(
        w1_ref[...], x_ref[...],
        dimension_numbers=(((1,), (1,)), ((), ())),
        preferred_element_type=jnp.float32,
    )
    # bias (H, 1) broadcast over lanes + ReLU on the VPU (f32).
    h_t = jnp.maximum(h_t + b1_ref[...], 0.0)
    # linear2 (H -> 1): VPU multiply + small sublane reduction; w2: (H,1), b2: (1,1)
    z = jnp.sum(h_t * w2_ref[...], axis=0, keepdims=True) + b2_ref[...]   # (1, TB)
    o_ref[...] = jax.nn.sigmoid(z)            # lane-dense (1, TB) store


def _pick_batch_tile(batch, block_batch):
    """Pick the batch tile size (multiple of 128 for tiled cases)."""
    if batch < 256:
        # Tiny batch: single full-extent tile (launch-overhead dominated anyway).
        return batch
    if batch > block_batch:
        return block_batch
    # 256 <= batch <= block_batch: split into >=2 grid steps so both v7x
    # TensorCores get work; keep the tile a multiple of 128.
    return min(block_batch, 128 * pl.cdiv(batch, 2 * 128))


def neural_net_forward(x, w1, b1, w2, b2, *, block_batch=1024):
    """x: (B, IN); w1: (H, IN); b1: (H,); w2: (1, H); b2: (1,)  ->  (B, 1) f32.

    The kernel streams x in its incoming dtype (f32 or bf16); do NOT cast x
    here -- a wrapper-side astype is its own HBM read+write pass and loses more
    than the narrower kernel-side reads gain.
    """
    B, in_features = x.shape
    H = w1.shape[0]

    tb = _pick_batch_tile(B, block_batch)
    grid = (pl.cdiv(B, tb),)          # ragged tail block handled by Pallas

    # Small, one-time casts (weights are a few KiB at most).
    w1c = w1.astype(x.dtype)                       # matmul operand dtype matches x
    b1c = b1.reshape(H, 1).astype(jnp.float32)
    w2c = w2.reshape(H, 1).astype(jnp.float32)
    b2c = b2.reshape(1, 1).astype(jnp.float32)

    # Only raise the scoped-VMEM limit when an oversized tile actually needs it
    # (double-buffered x + double-buffered out + resident weights + headroom).
    itemsize = jnp.dtype(x.dtype).itemsize
    vmem_need = 2 * tb * in_features * itemsize + 2 * tb * 4 \
        + (H * in_features * itemsize) + (1 << 20)
    compiler_kwargs = dict(dimension_semantics=("parallel",))   # 2 TCs on v7x
    if vmem_need > (14 << 20):          # beyond v5e's 16 MiB default scoped limit
        compiler_kwargs["vmem_limit_bytes"] = min(int(vmem_need * 1.25), 56 << 20)

    out = pl.pallas_call(
        mlp_kernel,
        out_shape=jax.ShapeDtypeStruct((1, B), jnp.float32),
        grid=grid,
        in_specs=[
            pl.BlockSpec((tb, in_features), lambda i: (i, 0)),   # x tile (pipelined)
            pl.BlockSpec((H, in_features), lambda i: (0, 0)),    # w1: resident
            pl.BlockSpec((H, 1), lambda i: (0, 0)),              # b1: resident
            pl.BlockSpec((H, 1), lambda i: (0, 0)),              # w2: resident
            pl.BlockSpec((1, 1), lambda i: (0, 0)),              # b2: resident
        ],
        out_specs=pl.BlockSpec((1, tb), lambda i: (0, i)),       # lane-dense output
        compiler_params=pltpu.CompilerParams(**compiler_kwargs),
    )(x, w1c, b1c, w2c, b2c)

    # (1, B) -> (B, 1), matching the nn.Module's output layout.
    return out[0, :].reshape(B, 1)


if __name__ == "__main__":
    key = jax.random.PRNGKey(0)
    kx, k1, k2, k3, k4 = jax.random.split(key, 5)

    # Parameters in torch nn.Linear layout: weight = (out_features, in_features).
    bound1 = 1.0 / (INPUT_SIZE ** 0.5)
    bound2 = 1.0 / (HIDDEN_SIZE ** 0.5)
    x = jax.random.normal(kx, (BATCH, INPUT_SIZE), jnp.float32)
    w1 = jax.random.uniform(k1, (HIDDEN_SIZE, INPUT_SIZE), jnp.float32, -bound1, bound1)
    b1 = jax.random.uniform(k2, (HIDDEN_SIZE,), jnp.float32, -bound1, bound1)
    w2 = jax.random.uniform(k3, (1, HIDDEN_SIZE), jnp.float32, -bound2, bound2)
    b2 = jax.random.uniform(k4, (1,), jnp.float32, -bound2, bound2)

    out = jax.block_until_ready(neural_net_forward(x, w1, b1, w2, b2))

    # Pure-JAX reference (identical math to the PyTorch module).
    ref = jax.nn.sigmoid(jnp.maximum(x @ w1.T + b1, 0.0) @ w2.T + b2)
    assert out.shape == (BATCH, 1)
    assert jnp.allclose(out, ref, atol=1e-5, rtol=1e-5)
    print("KERNEL_OK")
</pallas_src>

<mosaic_0001>
module attributes {stable_mosaic.version = 11 : i64} {
  func.func @mlp_kernel(%arg0: i32, %arg1: memref<8x784xf32, #tpu.memory_space<vmem>>, %arg2: memref<5x784xf32, #tpu.memory_space<vmem>>, %arg3: memref<5x1xf32, #tpu.memory_space<vmem>>, %arg4: memref<5x1xf32, #tpu.memory_space<vmem>>, %arg5: memref<1x1xf32, #tpu.memory_space<vmem>>, %arg6: memref<1x8xf32, #tpu.memory_space<vmem>>) attributes {dimension_semantics = [#tpu.dimension_semantics<parallel>], iteration_bounds = array<i64: 1>, scalar_prefetch = 0 : i64, scratch_operands = 0 : i64, tpu.core_type = #tpu.core_type<tc>, window_params = [{transform_indices = @transform_0, window_bounds = array<i64: 8, 784>}, {pipeline_mode = #tpu.pipeline_mode<synchronous>, transform_indices = @transform_1, window_bounds = array<i64: 5, 784>}, {pipeline_mode = #tpu.pipeline_mode<synchronous>, transform_indices = @transform_2, window_bounds = array<i64: 5, 1>}, {pipeline_mode = #tpu.pipeline_mode<synchronous>, transform_indices = @transform_3, window_bounds = array<i64: 5, 1>}, {pipeline_mode = #tpu.pipeline_mode<synchronous>, transform_indices = @transform_4, window_bounds = array<i64: 1, 1>}, {transform_indices = @transform_5, window_bounds = array<i64: 1, 8>}]} {
    %c0 = arith.constant 0 : index
    %c0_0 = arith.constant 0 : index
    %0 = vector.load %arg2[%c0, %c0_0] : memref<5x784xf32, #tpu.memory_space<vmem>>, vector<5x784xf32>
    %c0_1 = arith.constant 0 : index
    %c0_2 = arith.constant 0 : index
    %1 = vector.load %arg1[%c0_1, %c0_2] : memref<8x784xf32, #tpu.memory_space<vmem>>, vector<8x784xf32>
    %cst = arith.constant dense<0.000000e+00> : vector<5x8xf32>
    %2 = tpu.matmul %0, %1, %cst {dimension_numbers = #tpu.dot_dimension_numbers<[1], [1], [0], [0], [0, 0, 1, 0], [], []>} : vector<5x784xf32>, vector<8x784xf32>, vector<5x8xf32> -> vector<5x8xf32>
    %c0_3 = arith.constant 0 : index
    %c0_4 = arith.constant 0 : index
    %3 = vector.load %arg3[%c0_3, %c0_4] : memref<5x1xf32, #tpu.memory_space<vmem>>, vector<5x1xf32>
    %4 = vector.broadcast %3 : vector<5x1xf32> to vector<5x8xf32>
    %5 = arith.addf %2, %4 : vector<5x8xf32>
    %cst_5 = arith.constant 0.000000e+00 : f32
    %6 = vector.broadcast %cst_5 : f32 to vector<5x8xf32>
    %7 = arith.maximumf %5, %6 : vector<5x8xf32>
    %c0_6 = arith.constant 0 : index
    %c0_7 = arith.constant 0 : index
    %8 = vector.load %arg4[%c0_6, %c0_7] : memref<5x1xf32, #tpu.memory_space<vmem>>, vector<5x1xf32>
    %9 = vector.broadcast %8 : vector<5x1xf32> to vector<5x8xf32>
    %10 = arith.mulf %7, %9 : vector<5x8xf32>
    %cst_8 = arith.constant dense<0.000000e+00> : vector<8xf32>
    %11 = vector.multi_reduction <add>, %10, %cst_8 [0] : vector<5x8xf32> to vector<8xf32>
    %12 = vector.shape_cast %11 : vector<8xf32> to vector<1x8xf32>
    %c0_9 = arith.constant 0 : index
    %c0_10 = arith.constant 0 : index
    %13 = vector.load %arg5[%c0_9, %c0_10] : memref<1x1xf32, #tpu.memory_space<vmem>>, vector<1x1xf32>
    %14 = vector.broadcast %13 : vector<1x1xf32> to vector<1x8xf32>
    %15 = arith.addf %12, %14 : vector<1x8xf32>
    %16 = arith.negf %15 : vector<1x8xf32>
    %17 = math.exp %16 : vector<1x8xf32>
    %cst_11 = arith.constant 1.000000e+00 : f32
    %18 = vector.broadcast %cst_11 : f32 to vector<1x8xf32>
    %19 = arith.addf %18, %17 : vector<1x8xf32>
    %20 = arith.divf %18, %19 : vector<1x8xf32>
    %c0_12 = arith.constant 0 : index
    %c0_13 = arith.constant 0 : index
    %21 = vector.load %arg6[%c0_12, %c0_13] : memref<1x8xf32, #tpu.memory_space<vmem>>, vector<1x8xf32>
    tpu.vector_store %arg6[%c0_12, %c0_13], %20 {strides = array<i32>} : memref<1x8xf32, #tpu.memory_space<vmem>>, vector<1x8xf32>,
    return
  }
  func.func @transform_0(%arg0: i32) -> (i32, i32) {
    %c0_i32 = arith.constant 0 : i32
    %c0_i32_0 = arith.constant 0 : i32
    return %arg0, %c0_i32 : i32, i32
  }
  func.func @transform_1(%arg0: i32) -> (i32, i32) {
    %c0_i32 = arith.constant 0 : i32
    %c0_i32_0 = arith.constant 0 : i32
    %c0_i32_1 = arith.constant 0 : i32
    return %c0_i32, %c0_i32_0 : i32, i32
  }
  func.func @transform_2(%arg0: i32) -> (i32, i32) {
    %c0_i32 = arith.constant 0 : i32
    %c0_i32_0 = arith.constant 0 : i32
    %c0_i32_1 = arith.constant 0 : i32
    return %c0_i32, %c0_i32_0 : i32, i32
  }
  func.func @transform_3(%arg0: i32) -> (i32, i32) {
    %c0_i32 = arith.constant 0 : i32
    %c0_i32_0 = arith.constant 0 : i32
    %c0_i32_1 = arith.constant 0 : i32
    return %c0_i32, %c0_i32_0 : i32, i32
  }
  func.func @transform_4(%arg0: i32) -> (i32, i32) {
    %c0_i32 = arith.constant 0 : i32
    %c0_i32_0 = arith.constant 0 : i32
    %c0_i32_1 = arith.constant 0 : i32
    return %c0_i32, %c0_i32_0 : i32, i32
  }
  func.func @transform_5(%arg0: i32) -> (i32, i32) {
    %c0_i32 = arith.constant 0 : i32
    %c0_i32_0 = arith.constant 0 : i32
    return %c0_i32, %arg0 : i32, i32
  }
}

</mosaic_0001>

<llo_original>
// kernel: tpu_custom_call.1
$region0: #{tpu_custom_call.1}
  #allocation0 [shape = 'u32[]', space=smem, size = 0x4, offset = 0x4, fixed_abs, tag = 'smem constant byte address 0x4 - core index']
  #allocation1 [shape = 'u32[72,128]{1,0:T(1,128)}', space=vmem, size = 0x9000, scoped, tag = 'internal scratch']
  #allocation2 [shape = 'f32[1,1]{1,0:T(1,128)S(1)}', space=vmem, size = 0x200, scoped, tag = 'scoped memory for tpu_custom_call.1']
  %s0 = inlined_call_operand.hbm [shape: f32[8,784], index: 0, kind: input, shape index: {}]
  %s1 = inlined_call_operand.hbm [shape: f32[5,784], index: 1, kind: input, shape index: {}]
  %s2 = inlined_call_operand.vmem [shape: f32[5,1], index: 2, kind: input, shape index: {}]
  %s3 = inlined_call_operand.vmem [shape: f32[5,1], index: 3, kind: input, shape index: {}]
  %s4 = inlined_call_operand.<no memory space> [shape: f32[1,1], index: 4, kind: input, shape index: {}]
  %s5 = inlined_call_operand.hbm [shape: f32[1,8], index: 5, kind: output, shape index: {}]
  %s6 = sld [smem:[#allocation0]]
  $region38: #{tpu_custom_call.1} parent=0
    _
  %s8 = ssub.s32 1, %s6
  %s9 = scalar_select 0, %s8, %s6
  %v10 = vstv %s4
  %11 = vst [vmem:[#allocation2] sm:$0x1] %v10
  $region1: #{tpu_custom_call.1} parent=0
    #allocation3 [shape = 'u8[28672]{0}', space=vmem, size = 0x7000, scoped, tag = 'input window, operand 0, single buffered']
    #allocation4 [shape = 's32[1]{0}', space=sflag, size = 0x4, scoped, tag = 'scoped memory for tpu_custom_call.1']
    #allocation5 [shape = 's32[1]{0}', space=sflag, size = 0x4, scoped, tag = 'scoped memory for tpu_custom_call.1']
    #allocation6 [shape = 'u8[28672]{0}', space=vmem, size = 0x7000, scoped, tag = 'input window, operand 1, single buffered']
    #allocation7 [shape = 's32[1]{0}', space=sflag, size = 0x4, scoped, tag = 'scoped memory for tpu_custom_call.1']
    #allocation8 [shape = 'u8[512]{0}', space=vmem, size = 0x400, scoped, tag = 'output window, operand 0, single buffered']
    %12 = vsyncpa [#allocation4], 0
    %13 = vsyncpa [#allocation7], 0
    %14 = vsyncpa [#allocation5], 0
    // Predicated region
    $region2: #{tpu_custom_call.1} parent=1 // pred_check
      _
    $region3: #{tpu_custom_call.1} parent=1 // pred_check_branch
      %16 = sbr.rel (0) target = $region5
    $region4: #{tpu_custom_call.1} parent=1 // pred_region
      %18 = vsyncadd [#allocation4], 0
      %s20 = sshll.u32 %s0, 4
      %s21 = int_to_ptr.hbm [resolvable:$true] %s20
      %s22 = sshll.u32 [#allocation3], 4
      %s23 = int_to_ptr.vmem [resolvable:$true] %s22
      %25 = dma.hbm_to_vmem [thread:$0]  %s21, 896, %s23, [#allocation4]
    $region5: #{tpu_custom_call.1} parent=1 // pred_fallthru
      _
    // Predicated region
    $region6: #{tpu_custom_call.1} parent=1 // pred_check
      _
    $region7: #{tpu_custom_call.1} parent=1 // pred_check_branch
      %27 = sbr.rel (0) target = $region9
    $region8: #{tpu_custom_call.1} parent=1 // pred_region
      %29 = vsyncadd [#allocation7], 0
      %s31 = sshll.u32 %s1, 4
      %s32 = int_to_ptr.hbm [resolvable:$true] %s31
      %s33 = sshll.u32 [#allocation6], 4
      %s34 = int_to_ptr.vmem [resolvable:$true] %s33
      %36 = dma.hbm_to_vmem [thread:$0]  %s32, 896, %s34, [#allocation7]
    $region9: #{tpu_custom_call.1} parent=1 // pred_fallthru
      _
    // Predicated region
    $region10: #{tpu_custom_call.1} parent=1 // pred_check
      _
    $region11: #{tpu_custom_call.1} parent=1 // pred_check_branch
      %38 = sbr.rel (0) target = $region13
    $region12: #{tpu_custom_call.1} parent=1 // pred_region
      _
    $region13: #{tpu_custom_call.1} parent=1 // pred_fallthru
      _
    // Predicated region
    $region14: #{tpu_custom_call.1} parent=1 // pred_check
      _
    $region15: #{tpu_custom_call.1} parent=1 // pred_check_branch
      %40 = sbr.rel (0) target = $region17
    $region16: #{tpu_custom_call.1} parent=1 // pred_region
      _
    $region17: #{tpu_custom_call.1} parent=1 // pred_fallthru
      _
    // Predicated region
    $region18: #{tpu_custom_call.1} parent=1 // pred_check
      _
    $region19: #{tpu_custom_call.1} parent=1 // pred_check_branch
      %42 = sbr.rel (0) target = $region21
    $region20: #{tpu_custom_call.1} parent=1 // pred_region
      _
    $region21: #{tpu_custom_call.1} parent=1 // pred_fallthru
      _
    // Predicated region
    $region22: #{tpu_custom_call.1} parent=1 // pred_check
      _
    $region23: #{tpu_custom_call.1} parent=1 // pred_check_branch
      %44 = sbr.rel (0) target = $region25
    $region24: #{tpu_custom_call.1} parent=1 // pred_region
      %46 = dma.done [#allocation4], 896
    $region25: #{tpu_custom_call.1} parent=1 // pred_fallthru
      _
    // Predicated region
    $region26: #{tpu_custom_call.1} parent=1 // pred_check
      _
    $region27: #{tpu_custom_call.1} parent=1 // pred_check_branch
      %48 = sbr.rel (0) target = $region29
    $region28: #{tpu_custom_call.1} parent=1 // pred_region
      %50 = dma.done [#allocation7], 896
    $region29: #{tpu_custom_call.1} parent=1 // pred_fallthru
      _
    %v51 = vld [vmem:[#allocation6] sm:$0x1f]
    %v52 = vld [vmem:[#allocation6 + $0x8] sm:$0x1f]
    %v53 = vld [vmem:[#allocation6 + $0x10] sm:$0x1f]
    %v54 = vld [vmem:[#allocation6 + $0x18] sm:$0x1f]
    %v55 = vld [vmem:[#allocation6 + $0x20] sm:$0x1f]
    %v56 = vld [vmem:[#allocation6 + $0x28] sm:$0x1f]
    %v57 = vld [vmem:[#allocation6 + $0x30] sm:$0x1f]
    %v58 = vld [vmem:[#allocation3] sm:$0xff]
    %v59 = vld [vmem:[#allocation3 + $0x8] sm:$0xff]
    %v60 = vld [vmem:[#allocation3 + $0x10] sm:$0xff]
    %v61 = vld [vmem:[#allocation3 + $0x18] sm:$0xff]
    %v62 = vld [vmem:[#allocation3 + $0x20] sm:$0xff]
    %v63 = vld [vmem:[#allocation3 + $0x28] sm:$0xff]
    %v64 = vld [vmem:[#allocation3 + $0x30] sm:$0xff]
    %v65 = vld [vmem:[%s2] sm:$0x1f]
    %67 = vset.pattern.permute.xlu0 0
    %68 = vperm.xlu0 %67, %v65
    %v69 = vpop.permute.xlu0 %68
    %vm71 = vcmask 130048
    %v73 = vsel %vm71, %v57, 0
    %v76 = vsel %vm71, %v64, 0
    %78 = vmatpush.xpose.msra.mxu0 0.0
    %79 = vmatpush.xpose.msra.mxu0 0.0
    %80 = vmatpush.xpose.msra.mxu0 0.0
    %81 = vmatpush.xpose.msra.mxu0 0.0
    %82 = vmatpush.xpose.msra.mxu0 0.0
    %83 = vmatpush.xpose.msra.mxu0 0.0
    %84 = vmatpush.xpose.msra.mxu0 0.0
    %85 = vmatpush.xpose.msra.mxu0 0.0
    %86 = vmatpush.xpose.msra.mxu0 0.0
    %87 = vmatpush.xpose.msra.mxu0 0.0
    %88 = vmatpush.xpose.msra.mxu0 0.0
    %89 = vmatpush.xpose.msra.mxu0 0.0
    %90 = vmatpush.xpose.msra.mxu0 0.0
    %91 = vmatpush.xpose.msra.mxu0 0.0
    %92 = vmatpush.xpose.msra.mxu0 0.0
    %93 = vmatpush.xpose.msra.mxu0 %v58
    %94 = vmatmul.f32.gmra.mxu0 %v51
    %v95 = vpop.f32.mrf.mxu0
    %v96 = vadd.f32 %v69, %v95
    %97 = vdwg.mxu0
    %98 = vmatpush.xpose.msra.mxu0 0.0
    %99 = vmatpush.xpose.msra.mxu0 0.0
    %100 = vmatpush.xpose.msra.mxu0 0.0
    %101 = vmatpush.xpose.msra.mxu0 0.0
    %102 = vmatpush.xpose.msra.mxu0 0.0
    %103 = vmatpush.xpose.msra.mxu0 0.0
    %104 = vmatpush.xpose.msra.mxu0 0.0
    %105 = vmatpush.xpose.msra.mxu0 0.0
    %106 = vmatpush.xpose.msra.mxu0 0.0
    %107 = vmatpush.xpose.msra.mxu0 0.0
    %108 = vmatpush.xpose.msra.mxu0 0.0
    %109 = vmatpush.xpose.msra.mxu0 0.0
    %110 = vmatpush.xpose.msra.mxu0 0.0
    %111 = vmatpush.xpose.msra.mxu0 0.0
    %112 = vmatpush.xpose.msra.mxu0 0.0
    %113 = vmatpush.xpose.msra.mxu0 %v59
    %114 = vmatmul.f32.gmra.mxu0 %v52
    %v115 = vpop.f32.mrf.mxu0
    %v116 = vadd.f32 %v96, %v115
    %117 = vdwg.mxu0
    %118 = vmatpush.xpose.msra.mxu0 0.0
    %119 = vmatpush.xpose.msra.mxu0 0.0
    %120 = vmatpush.xpose.msra.mxu0 0.0
    %121 = vmatpush.xpose.msra.mxu0 0.0
    %122 = vmatpush.xpose.msra.mxu0 0.0
    %123 = vmatpush.xpose.msra.mxu0 0.0
    %124 = vmatpush.xpose.msra.mxu0 0.0
    %125 = vmatpush.xpose.msra.mxu0 0.0
    %126 = vmatpush.xpose.msra.mxu0 0.0
    %127 = vmatpush.xpose.msra.mxu0 0.0
    %128 = vmatpush.xpose.msra.mxu0 0.0
    %129 = vmatpush.xpose.msra.mxu0 0.0
    %130 = vmatpush.xpose.msra.mxu0 0.0
    %131 = vmatpush.xpose.msra.mxu0 0.0
    %132 = vmatpush.xpose.msra.mxu0 0.0
    %133 = vmatpush.xpose.msra.mxu0 %v60
    %134 = vmatmul.f32.gmra.mxu0 %v53
    %v135 = vpop.f32.mrf.mxu0
    %v136 = vadd.f32 %v116, %v135
    %137 = vdwg.mxu0
    %138 = vmatpush.xpose.msra.mxu0 0.0
    %139 = vmatpush.xpose.msra.mxu0 0.0
    %140 = vmatpush.xpose.msra.mxu0 0.0
    %141 = vmatpush.xpose.msra.mxu0 0.0
    %142 = vmatpush.xpose.msra.mxu0 0.0
    %143 = vmatpush.xpose.msra.mxu0 0.0
    %144 = vmatpush.xpose.msra.mxu0 0.0
    %145 = vmatpush.xpose.msra.mxu0 0.0
    %146 = vmatpush.xpose.msra.mxu0 0.0
    %147 = vmatpush.xpose.msra.mxu0 0.0
    %148 = vmatpush.xpose.msra.mxu0 0.0
    %149 = vmatpush.xpose.msra.mxu0 0.0
    %150 = vmatpush.xpose.msra.mxu0 0.0
    %151 = vmatpush.xpose.msra.mxu0 0.0
    %152 = vmatpush.xpose.msra.mxu0 0.0
    %153 = vmatpush.xpose.msra.mxu0 %v61
    %154 = vmatmul.f32.gmra.mxu0 %v54
    %v155 = vpop.f32.mrf.mxu0
    %v156 = vadd.f32 %v136, %v155
    %157 = vdwg.mxu0
    %158 = vmatpush.xpose.msra.mxu0 0.0
    %159 = vmatpush.xpose.msra.mxu0 0.0
    %160 = vmatpush.xpose.msra.mxu0 0.0
    %161 = vmatpush.xpose.msra.mxu0 0.0
    %162 = vmatpush.xpose.msra.mxu0 0.0
    %163 = vmatpush.xpose.msra.mxu0 0.0
    %164 = vmatpush.xpose.msra.mxu0 0.0
    %165 = vmatpush.xpose.msra.mxu0 0.0
    %166 = vmatpush.xpose.msra.mxu0 0.0
    %167 = vmatpush.xpose.msra.mxu0 0.0
    %168 = vmatpush.xpose.msra.mxu0 0.0
    %169 = vmatpush.xpose.msra.mxu0 0.0
    %170 = vmatpush.xpose.msra.mxu0 0.0
    %171 = vmatpush.xpose.msra.mxu0 0.0
    %172 = vmatpush.xpose.msra.mxu0 0.0
    %173 = vmatpush.xpose.msra.mxu0 %v62
    %174 = vmatmul.f32.gmra.mxu0 %v55
    %v175 = vpop.f32.mrf.mxu0
    %v176 = vadd.f32 %v156, %v175
    %177 = vdwg.mxu0
    %178 = vmatpush.xpose.msra.mxu0 0.0
    %179 = vmatpush.xpose.msra.mxu0 0.0
    %180 = vmatpush.xpose.msra.mxu0 0.0
    %181 = vmatpush.xpose.msra.mxu0 0.0
    %182 = vmatpush.xpose.msra.mxu0 0.0
    %183 = vmatpush.xpose.msra.mxu0 0.0
    %184 = vmatpush.xpose.msra.mxu0 0.0
    %185 = vmatpush.xpose.msra.mxu0 0.0
    %186 = vmatpush.xpose.msra.mxu0 0.0
    %187 = vmatpush.xpose.msra.mxu0 0.0
    %188 = vmatpush.xpose.msra.mxu0 0.0
    %189 = vmatpush.xpose.msra.mxu0 0.0
    %190 = vmatpush.xpose.msra.mxu0 0.0
    %191 = vmatpush.xpose.msra.mxu0 0.0
    %192 = vmatpush.xpose.msra.mxu0 0.0
    %193 = vmatpush.xpose.msra.mxu0 %v63
    %194 = vmatmul.f32.gmra.mxu0 %v56
    %v195 = vpop.f32.mrf.mxu0
    %v196 = vadd.f32 %v176, %v195
    %197 = vdwg.mxu0
    %198 = vmatpush.xpose.msra.mxu0 0.0
    %199 = vmatpush.xpose.msra.mxu0 0.0
    %200 = vmatpush.xpose.msra.mxu0 0.0
    %201 = vmatpush.xpose.msra.mxu0 0.0
    %202 = vmatpush.xpose.msra.mxu0 0.0
    %203 = vmatpush.xpose.msra.mxu0 0.0
    %204 = vmatpush.xpose.msra.mxu0 0.0
    %205 = vmatpush.xpose.msra.mxu0 0.0
    %206 = vmatpush.xpose.msra.mxu0 0.0
    %207 = vmatpush.xpose.msra.mxu0 0.0
    %208 = vmatpush.xpose.msra.mxu0 0.0
    %209 = vmatpush.xpose.msra.mxu0 0.0
    %210 = vmatpush.xpose.msra.mxu0 0.0
    %211 = vmatpush.xpose.msra.mxu0 0.0
    %212 = vmatpush.xpose.msra.mxu0 0.0
    %213 = vmatpush.xpose.msra.mxu0 %v76
    %214 = vmatmul.f32.gmra.mxu0 %v73
    %v215 = vpop.f32.mrf.mxu0
    %v216 = vadd.f32 %v196, %v215
    %217 = vdwg.mxu0
    %v218 = vmax.f32 %v216, 0.0
    %v219 = vld [vmem:[%s3] sm:$0x1f]
    %221 = vset.pattern.permute.xlu0 0
    %222 = vperm.xlu0 %221, %v219
    %v223 = vpop.permute.xlu0 %222
    %v225 = vmul.f32 %v218, %v223
    %vm226 = vcmask 61440
    %v227 = vsel %vm226, %v225, 0.0
    %v228 = vrot.slane %v227, 4
    %v229 = vadd.f32 %v227, %v228
    %v230 = vrot.slane %v229, 2
    %v231 = vadd.f32 %v229, %v230
    %v232 = vrot.slane %v231, 1
    %v233 = vadd.f32 %v231, %v232
    %v234 = vld [vmem:[#allocation2] sm:$0x1]
    %236 = vset.pattern.permute.xlu0 0
    %237 = vperm.xlu0 %236, %v234
    %v238 = vpop.permute.xlu0 %237
    %v240 = vperm.slane %v238, 0
    %v241 = vadd.f32 %v233, %v240
    %v242 = vxor.u32 %v241, 2147483648
    %v243 = vmul.f32 %v242, 1.442695
    %v244 = vpow.pop %v243
    %v245 = vadd.f32 %v244, 1.0
    %v246 = vrcp.pop %v245
    %v247 = vmul.f32 %v245, %v246
    %v248 = vsub.f32 1.0, %v247
    %v249 = vmul.f32 %v246, %v248
    %v250 = vadd.f32 %v246, %v249
    %vm251 = vweird.f32 %v245
    %vm252 = vweird.f32 %v246
    %vm253 = vmor %vm251, %vm252
    %v254 = vsel %vm253, %v246, %v250
    %v255 = vand.u32 2147483647, %v245
    %vm256 = vcmp.eq.f32.partialorder %v255, 8.507059e+37
    %v257 = vand.u32 %v245, 2147483648
    %v258 = vor.u32 1.1754944e-38, %v257
    %v259 = vsel %vm256, %v258, %v254
    %v260 = vmul.f32 1.0, %v259
    %vm261 = vcmask 57344
    %262 = vst.msk [vmem:[#allocation8] sm:$0x1] %vm261, %v260
    // Predicated region
    $region30: #{tpu_custom_call.1} parent=1 // pred_check
      _
    $region31: #{tpu_custom_call.1} parent=1 // pred_check_branch
      %264 = sbr.rel (0) target = $region33
    $region32: #{tpu_custom_call.1} parent=1 // pred_region
      %266 = vsyncadd [#allocation5], 0
      %s268 = sshll.u32 [#allocation8], 4
      %s269 = int_to_ptr.vmem [resolvable:$true] %s268
      %s270 = sshll.u32 %s5, 4
      %s271 = int_to_ptr.hbm [resolvable:$true] %s270
      %273 = dma.vmem_to_hbm [thread:$0]  %s269, 16, %s271, [#allocation5]
    $region33: #{tpu_custom_call.1} parent=1 // pred_fallthru
      _
    // Predicated region
    $region34: #{tpu_custom_call.1} parent=1 // pred_check
      _
    $region35: #{tpu_custom_call.1} parent=1 // pred_check_branch
      %275 = sbr.rel (0) target = $region37
    $region36: #{tpu_custom_call.1} parent=1 // pred_region
      %277 = dma.done [#allocation5], 16
    $region37: #{tpu_custom_call.1} parent=1 // pred_fallthru
      _
    %278 = vsyncpa [#allocation4], 1
    %279 = vsyncpa [#allocation7], 1
    %280 = vsyncpa [#allocation5], 1

</llo_original>
